<compile_context>
chip_gen: v5e
topology: v5e:2x2
jax: 0.10.0
libtpu: 0.0.40
codegen_flags: <defaults>
</compile_context>

<pallas_src>
import math
from functools import partial

import jax
import jax.numpy as jnp
from jax import lax
from jax.experimental import pallas as pl
from jax.experimental.pallas import tpu as pltpu


def _attention_kernel(x_ref, w_attn_ref, b_attn_ref, w_proj_ref, b_proj_ref,
                      head_mask_ref, bias_ref, o_ref, *, n_head):
    BT, C = x_ref.shape
    hd = C // n_head
    scale = 1.0 / math.sqrt(hd)

    x = x_ref[...]                                                   # (BT, C)

    # Fused QKV projection over all B*T rows: one MXU matmul.
    qkv = jnp.dot(x, w_attn_ref[...],
                  preferred_element_type=jnp.float32) + b_attn_ref[...]  # (BT, 3C)
    q = qkv[:, 0 * C:1 * C] * scale          # scale applied once, not per head
    k = qkv[:, 1 * C:2 * C]
    v = qkv[:, 2 * C:3 * C]

    head_mask = head_mask_ref[...]           # (H*BT, C): 1 iff lane c belongs to head h

    # Replicate K/V once per head along sublanes and zero lanes of other heads.
    # All heads are then two reasonably shaped MXU matmuls -- no per-head loop,
    # no lane slicing/concat, no explicit transposes.
    k_rep = jnp.tile(k, (n_head, 1)) * head_mask                     # (H*BT, C)
    v_rep = jnp.tile(v, (n_head, 1)) * head_mask                     # (H*BT, C)

    # Scores for every (head, key position) at once: (BT, H*BT).
    # dot_general contracting the last dims avoids an explicit k.T.
    s = lax.dot_general(q, k_rep, (((1,), (1,)), ((), ())),
                        preferred_element_type=jnp.float32)
    s = s + bias_ref[...]                    # additive mask: 0 valid / -1e30 masked

    # Softmax with a shared per-row max (over all heads): the shift cancels
    # inside each head's normalization, so this is mathematically identical to
    # the per-head softmax and keeps exp() stable.
    m = jnp.max(s, axis=-1, keepdims=True)
    p = jnp.exp(s - m)                       # masked entries underflow to exactly 0

    # Numerator and per-head denominator via two MXU matmuls.  Using head_mask
    # as the RHS broadcasts each head's sum across that head's hd output lanes,
    # so `y` lands directly in the (BT, C) head-major layout PyTorch produces.
    num = jnp.dot(p, v_rep, preferred_element_type=jnp.float32)      # (BT, C)
    den = jnp.dot(p, head_mask, preferred_element_type=jnp.float32)  # (BT, C)
    y = num * (1.0 / jnp.maximum(den, 1e-38))  # exact reciprocal-then-multiply

    out = jnp.dot(y, w_proj_ref[...],
                  preferred_element_type=jnp.float32) + b_proj_ref[...]  # (BT, C)
    o_ref[...] = out.astype(o_ref.dtype)


def attention_pallas(x, w_attn, b_attn, w_proj, b_proj, mask, n_head):
    B, T, C = x.shape
    hd = C // n_head
    BT = B * T

    x_flat = x.reshape(BT, C)                # free, contiguous reshape outside the kernel

    # Head-selector mask: head_mask[h*BT + j, c] = 1 iff lane c belongs to head h.
    head_of_lane = jnp.arange(C, dtype=jnp.int32) // hd
    head_of_row = jnp.repeat(jnp.arange(n_head, dtype=jnp.int32), BT)
    head_mask = (head_of_row[:, None] == head_of_lane[None, :]).astype(jnp.float32)

    # Additive score bias precomputed outside the kernel:
    # 0 where (same batch AND causal), -1e30 elsewhere (covers all head blocks).
    causal = (mask != 0)                                             # (T, T)
    batch_eq = jnp.eye(B, dtype=bool)                                # (B, B)
    valid = (batch_eq[:, None, :, None] & causal[None, :, None, :]).reshape(BT, BT)
    bias_bd = jnp.where(jnp.tile(valid, (1, n_head)), 0.0, -1e30).astype(jnp.float32)

    kernel = partial(_attention_kernel, n_head=n_head)
    # Single invocation: whole problem fits comfortably in VMEM at this size.
    # (On v7x one TensorCore idles for this toy shape; when scaling up, split B
    #  or the query rows across a leading "parallel" grid axis and switch the
    #  score/softmax to a KV-tiled online-softmax formulation.)
    out_flat = pl.pallas_call(
        kernel,
        out_shape=jax.ShapeDtypeStruct((BT, C), x.dtype),
        grid=(1,),
        in_specs=[
            pl.BlockSpec((BT, C), lambda i: (0, 0)),                 # x (flattened)
            pl.BlockSpec((C, 3 * C), lambda i: (0, 0)),              # W_attn (C, 3C)
            pl.BlockSpec((1, 3 * C), lambda i: (0, 0)),              # b_attn
            pl.BlockSpec((C, C), lambda i: (0, 0)),                  # W_proj (C, C)
            pl.BlockSpec((1, C), lambda i: (0, 0)),                  # b_proj
            pl.BlockSpec((n_head * BT, C), lambda i: (0, 0)),        # head-selector mask
            pl.BlockSpec((BT, n_head * BT), lambda i: (0, 0)),       # additive score bias
        ],
        out_specs=pl.BlockSpec((BT, C), lambda i: (0, 0)),
        compiler_params=pltpu.CompilerParams(dimension_semantics=("arbitrary",)),
    )(x_flat, w_attn, b_attn, w_proj, b_proj, head_mask, bias_bd)

    return out_flat.reshape(B, T, C)


def attention_ref(x, w_attn, b_attn, w_proj, b_proj, mask, n_head):
    # Pure-JAX reference mirroring the PyTorch forward.
    B, T, C = x.shape
    hd = C // n_head
    qkv = x @ w_attn + b_attn                                        # (B, T, 3C)
    q, k, v = jnp.split(qkv, 3, axis=2)
    q = q.reshape(B, T, n_head, hd).transpose(0, 2, 1, 3)
    k = k.reshape(B, T, n_head, hd).transpose(0, 2, 1, 3)
    v = v.reshape(B, T, n_head, hd).transpose(0, 2, 1, 3)
    att = jnp.einsum("bhqd,bhkd->bhqk", q, k) * (1.0 / math.sqrt(hd))
    att = jnp.where(mask[None, None] == 0, -jnp.inf, att)
    att = jax.nn.softmax(att, axis=-1)
    y = jnp.einsum("bhqk,bhkd->bhqd", att, v)
    y = y.transpose(0, 2, 1, 3).reshape(B, T, C)
    return y @ w_proj + b_proj


if __name__ == "__main__":
    # Config: n_embd=32, n_head=4, block_size=16; inputs B=2, T=8.
    B, T, C, n_head, block_size = 2, 8, 32, 4, 16

    key = jax.random.PRNGKey(0)
    kx, k1, k2, k3, k4 = jax.random.split(key, 5)
    x = jax.random.normal(kx, (B, T, C), dtype=jnp.float32)
    w_attn = 0.02 * jax.random.normal(k1, (C, 3 * C), dtype=jnp.float32)
    b_attn = 0.02 * jax.random.normal(k2, (1, 3 * C), dtype=jnp.float32)
    w_proj = 0.02 * jax.random.normal(k3, (C, C), dtype=jnp.float32)
    b_proj = 0.02 * jax.random.normal(k4, (1, C), dtype=jnp.float32)

    # registered buffer: tril(ones(block_size, block_size)), sliced to [:T, :T]
    full_mask = jnp.tril(jnp.ones((block_size, block_size), dtype=jnp.float32))
    mask = full_mask[:T, :T]

    out = attention_pallas(x, w_attn, b_attn, w_proj, b_proj, mask, n_head)
    out = jax.block_until_ready(out)

    ref = attention_ref(x, w_attn, b_attn, w_proj, b_proj, mask, n_head)
    assert out.shape == (B, T, C)
    assert jnp.allclose(out, ref, atol=1e-5, rtol=1e-5), "mismatch vs reference"

    print("KERNEL_OK")
</pallas_src>

<mosaic_0001>
module attributes {stable_mosaic.version = 11 : i64} {
  func.func @_attention_kernel(%arg0: i32, %arg1: memref<16x32xf32, #tpu.memory_space<vmem>>, %arg2: memref<32x96xf32, #tpu.memory_space<vmem>>, %arg3: memref<1x96xf32, #tpu.memory_space<vmem>>, %arg4: memref<32x32xf32, #tpu.memory_space<vmem>>, %arg5: memref<1x32xf32, #tpu.memory_space<vmem>>, %arg6: memref<64x32xf32, #tpu.memory_space<vmem>>, %arg7: memref<16x64xf32, #tpu.memory_space<vmem>>, %arg8: memref<16x32xf32, #tpu.memory_space<vmem>>) attributes {dimension_semantics = [#tpu.dimension_semantics<arbitrary>], iteration_bounds = array<i64: 1>, scalar_prefetch = 0 : i64, scratch_operands = 0 : i64, tpu.core_type = #tpu.core_type<tc>, window_params = [{pipeline_mode = #tpu.pipeline_mode<synchronous>, transform_indices = @transform_0, window_bounds = array<i64: 16, 32>}, {pipeline_mode = #tpu.pipeline_mode<synchronous>, transform_indices = @transform_1, window_bounds = array<i64: 32, 96>}, {pipeline_mode = #tpu.pipeline_mode<synchronous>, transform_indices = @transform_2, window_bounds = array<i64: 1, 96>}, {pipeline_mode = #tpu.pipeline_mode<synchronous>, transform_indices = @transform_3, window_bounds = array<i64: 32, 32>}, {pipeline_mode = #tpu.pipeline_mode<synchronous>, transform_indices = @transform_4, window_bounds = array<i64: 1, 32>}, {pipeline_mode = #tpu.pipeline_mode<synchronous>, transform_indices = @transform_5, window_bounds = array<i64: 64, 32>}, {pipeline_mode = #tpu.pipeline_mode<synchronous>, transform_indices = @transform_6, window_bounds = array<i64: 16, 64>}, {pipeline_mode = #tpu.pipeline_mode<synchronous>, transform_indices = @transform_7, window_bounds = array<i64: 16, 32>}]} {
    %c0 = arith.constant 0 : index
    %c0_0 = arith.constant 0 : index
    %0 = vector.load %arg1[%c0, %c0_0] : memref<16x32xf32, #tpu.memory_space<vmem>>, vector<16x32xf32>
    %c0_1 = arith.constant 0 : index
    %c0_2 = arith.constant 0 : index
    %1 = vector.load %arg2[%c0_1, %c0_2] : memref<32x96xf32, #tpu.memory_space<vmem>>, vector<32x96xf32>
    %cst = arith.constant dense<0.000000e+00> : vector<16x96xf32>
    %2 = tpu.matmul %0, %1, %cst {dimension_numbers = #tpu.dot_dimension_numbers<[1], [0], [0], [1], [0, 0, 1, 1], [], []>} : vector<16x32xf32>, vector<32x96xf32>, vector<16x96xf32> -> vector<16x96xf32>
    %c0_3 = arith.constant 0 : index
    %c0_4 = arith.constant 0 : index
    %3 = vector.load %arg3[%c0_3, %c0_4] : memref<1x96xf32, #tpu.memory_space<vmem>>, vector<1x96xf32>
    %4 = vector.broadcast %3 : vector<1x96xf32> to vector<16x96xf32>
    %5 = arith.addf %2, %4 : vector<16x96xf32>
    %6 = vector.extract_strided_slice %5 {offsets = [0, 0], sizes = [16, 32], strides = [1, 1]} : vector<16x96xf32> to vector<16x32xf32>
    %cst_5 = arith.constant 0.353553385 : f32
    %7 = vector.broadcast %cst_5 : f32 to vector<16x32xf32>
    %8 = arith.mulf %6, %7 : vector<16x32xf32>
    %9 = vector.extract_strided_slice %5 {offsets = [0, 32], sizes = [16, 32], strides = [1, 1]} : vector<16x96xf32> to vector<16x32xf32>
    %10 = vector.extract_strided_slice %5 {offsets = [0, 64], sizes = [16, 32], strides = [1, 1]} : vector<16x96xf32> to vector<16x32xf32>
    %c0_6 = arith.constant 0 : index
    %c0_7 = arith.constant 0 : index
    %11 = vector.load %arg6[%c0_6, %c0_7] : memref<64x32xf32, #tpu.memory_space<vmem>>, vector<64x32xf32>
    %12 = tpu.concatenate %9, %9, %9, %9 in 0 : vector<16x32xf32>, vector<16x32xf32>, vector<16x32xf32>, vector<16x32xf32> -> vector<64x32xf32>
    %13 = arith.mulf %12, %11 : vector<64x32xf32>
    %14 = tpu.concatenate %10, %10, %10, %10 in 0 : vector<16x32xf32>, vector<16x32xf32>, vector<16x32xf32>, vector<16x32xf32> -> vector<64x32xf32>
    %15 = arith.mulf %14, %11 : vector<64x32xf32>
    %cst_8 = arith.constant dense<0.000000e+00> : vector<16x64xf32>
    %16 = tpu.matmul %8, %13, %cst_8 {dimension_numbers = #tpu.dot_dimension_numbers<[1], [1], [0], [0], [0, 0, 1, 0], [], []>} : vector<16x32xf32>, vector<64x32xf32>, vector<16x64xf32> -> vector<16x64xf32>
    %c0_9 = arith.constant 0 : index
    %c0_10 = arith.constant 0 : index
    %17 = vector.load %arg7[%c0_9, %c0_10] : memref<16x64xf32, #tpu.memory_space<vmem>>, vector<16x64xf32>
    %18 = arith.addf %16, %17 : vector<16x64xf32>
    %cst_11 = arith.constant dense<0xFF800000> : vector<16xf32>
    %19 = vector.multi_reduction <maximumf>, %18, %cst_11 [1] : vector<16x64xf32> to vector<16xf32>
    %20 = vector.shape_cast %19 : vector<16xf32> to vector<16x1xf32>
    %21 = vector.broadcast %20 : vector<16x1xf32> to vector<16x64xf32>
    %22 = arith.subf %18, %21 : vector<16x64xf32>
    %23 = math.exp %22 : vector<16x64xf32>
    %cst_12 = arith.constant dense<0.000000e+00> : vector<16x32xf32>
    %24 = tpu.matmul %23, %15, %cst_12 {dimension_numbers = #tpu.dot_dimension_numbers<[1], [0], [0], [1], [0, 0, 1, 1], [], []>} : vector<16x64xf32>, vector<64x32xf32>, vector<16x32xf32> -> vector<16x32xf32>
    %cst_13 = arith.constant dense<0.000000e+00> : vector<16x32xf32>
    %25 = tpu.matmul %23, %11, %cst_13 {dimension_numbers = #tpu.dot_dimension_numbers<[1], [0], [0], [1], [0, 0, 1, 1], [], []>} : vector<16x64xf32>, vector<64x32xf32>, vector<16x32xf32> -> vector<16x32xf32>
    %cst_14 = arith.constant 9.99999935E-39 : f32
    %26 = vector.broadcast %cst_14 : f32 to vector<16x32xf32>
    %27 = arith.maximumf %25, %26 : vector<16x32xf32>
    %cst_15 = arith.constant 1.000000e+00 : f32
    %28 = vector.broadcast %cst_15 : f32 to vector<16x32xf32>
    %29 = arith.divf %28, %27 : vector<16x32xf32>
    %30 = arith.mulf %24, %29 : vector<16x32xf32>
    %c0_16 = arith.constant 0 : index
    %c0_17 = arith.constant 0 : index
    %31 = vector.load %arg4[%c0_16, %c0_17] : memref<32x32xf32, #tpu.memory_space<vmem>>, vector<32x32xf32>
    %cst_18 = arith.constant dense<0.000000e+00> : vector<16x32xf32>
    %32 = tpu.matmul %30, %31, %cst_18 {dimension_numbers = #tpu.dot_dimension_numbers<[1], [0], [0], [1], [0, 0, 1, 1], [], []>} : vector<16x32xf32>, vector<32x32xf32>, vector<16x32xf32> -> vector<16x32xf32>
    %c0_19 = arith.constant 0 : index
    %c0_20 = arith.constant 0 : index
    %33 = vector.load %arg5[%c0_19, %c0_20] : memref<1x32xf32, #tpu.memory_space<vmem>>, vector<1x32xf32>
    %34 = vector.broadcast %33 : vector<1x32xf32> to vector<16x32xf32>
    %35 = arith.addf %32, %34 : vector<16x32xf32>
    %c0_21 = arith.constant 0 : index
    %c0_22 = arith.constant 0 : index
    %36 = vector.load %arg8[%c0_21, %c0_22] : memref<16x32xf32, #tpu.memory_space<vmem>>, vector<16x32xf32>
    tpu.vector_store %arg8[%c0_21, %c0_22], %35 {strides = array<i32>} : memref<16x32xf32, #tpu.memory_space<vmem>>, vector<16x32xf32>,
    return
  }
  func.func @transform_0(%arg0: i32) -> (i32, i32) {
    %c0_i32 = arith.constant 0 : i32
    %c0_i32_0 = arith.constant 0 : i32
    %c0_i32_1 = arith.constant 0 : i32
    return %c0_i32, %c0_i32_0 : i32, i32
  }
  func.func @transform_1(%arg0: i32) -> (i32, i32) {
    %c0_i32 = arith.constant 0 : i32
    %c0_i32_0 = arith.constant 0 : i32
    %c0_i32_1 = arith.constant 0 : i32
    return %c0_i32, %c0_i32_0 : i32, i32
  }
  func.func @transform_2(%arg0: i32) -> (i32, i32) {
    %c0_i32 = arith.constant 0 : i32
    %c0_i32_0 = arith.constant 0 : i32
    %c0_i32_1 = arith.constant 0 : i32
    return %c0_i32, %c0_i32_0 : i32, i32
  }
  func.func @transform_3(%arg0: i32) -> (i32, i32) {
    %c0_i32 = arith.constant 0 : i32
    %c0_i32_0 = arith.constant 0 : i32
    %c0_i32_1 = arith.constant 0 : i32
    return %c0_i32, %c0_i32_0 : i32, i32
  }
  func.func @transform_4(%arg0: i32) -> (i32, i32) {
    %c0_i32 = arith.constant 0 : i32
    %c0_i32_0 = arith.constant 0 : i32
    %c0_i32_1 = arith.constant 0 : i32
    return %c0_i32, %c0_i32_0 : i32, i32
  }
  func.func @transform_5(%arg0: i32) -> (i32, i32) {
    %c0_i32 = arith.constant 0 : i32
    %c0_i32_0 = arith.constant 0 : i32
    %c0_i32_1 = arith.constant 0 : i32
    return %c0_i32, %c0_i32_0 : i32, i32
  }
  func.func @transform_6(%arg0: i32) -> (i32, i32) {
    %c0_i32 = arith.constant 0 : i32
    %c0_i32_0 = arith.constant 0 : i32
    %c0_i32_1 = arith.constant 0 : i32
    return %c0_i32, %c0_i32_0 : i32, i32
  }
  func.func @transform_7(%arg0: i32) -> (i32, i32) {
    %c0_i32 = arith.constant 0 : i32
    %c0_i32_0 = arith.constant 0 : i32
    %c0_i32_1 = arith.constant 0 : i32
    return %c0_i32, %c0_i32_0 : i32, i32
  }
}

</mosaic_0001>

<llo_original>
// kernel: tpu_custom_call.1
$region0: #{tpu_custom_call.1}
  #allocation0 [shape = 'u32[]', space=smem, size = 0x4, offset = 0x4, fixed_abs, tag = 'smem constant byte address 0x4 - core index']
  #allocation1 [shape = 'u32[72,128]{1,0:T(1,128)}', space=vmem, size = 0x9000, scoped, tag = 'internal scratch']
  %s0 = inlined_call_operand.vmem [shape: f32[16,32], index: 0, kind: input, shape index: {}]
  %s1 = inlined_call_operand.vmem [shape: f32[32,96], index: 1, kind: input, shape index: {}]
  %s2 = inlined_call_operand.vmem [shape: f32[1,96], index: 2, kind: input, shape index: {}]
  %s3 = inlined_call_operand.vmem [shape: f32[32,32], index: 3, kind: input, shape index: {}]
  %s4 = inlined_call_operand.vmem [shape: f32[1,32], index: 4, kind: input, shape index: {}]
  %s5 = inlined_call_operand.vmem [shape: f32[64,32], index: 5, kind: input, shape index: {}]
  %s6 = inlined_call_operand.vmem [shape: f32[16,64], index: 6, kind: input, shape index: {}]
  %s7 = inlined_call_operand.hbm [shape: f32[16,32], index: 7, kind: output, shape index: {}]
  %s8 = sld [smem:[#allocation0]]
  $region38: #{tpu_custom_call.1} parent=0
    _
  %s10 = ssub.s32 1, %s8
  %s11 = scalar_select 0, %s10, %s8
  $region1: #{tpu_custom_call.1} parent=0
    #allocation2 [shape = 'u8[8192]{0}', space=vmem, size = 0x2000, scoped, tag = 'output window, operand 0, single buffered']
    #allocation3 [shape = 's32[1]{0}', space=sflag, size = 0x4, scoped, tag = 'scoped memory for tpu_custom_call.1']
    %12 = vsyncpa [#allocation3], 0
    // Predicated region
    $region2: #{tpu_custom_call.1} parent=1 // pred_check
      _
    $region3: #{tpu_custom_call.1} parent=1 // pred_check_branch
      %14 = sbr.rel (0) target = $region5
    $region4: #{tpu_custom_call.1} parent=1 // pred_region
      _
    $region5: #{tpu_custom_call.1} parent=1 // pred_fallthru
      _
    // Predicated region
    $region6: #{tpu_custom_call.1} parent=1 // pred_check
      _
    $region7: #{tpu_custom_call.1} parent=1 // pred_check_branch
      %16 = sbr.rel (0) target = $region9
    $region8: #{tpu_custom_call.1} parent=1 // pred_region
      _
    $region9: #{tpu_custom_call.1} parent=1 // pred_fallthru
      _
    // Predicated region
    $region10: #{tpu_custom_call.1} parent=1 // pred_check
      _
    $region11: #{tpu_custom_call.1} parent=1 // pred_check_branch
      %18 = sbr.rel (0) target = $region13
    $region12: #{tpu_custom_call.1} parent=1 // pred_region
      _
    $region13: #{tpu_custom_call.1} parent=1 // pred_fallthru
      _
    // Predicated region
    $region14: #{tpu_custom_call.1} parent=1 // pred_check
      _
    $region15: #{tpu_custom_call.1} parent=1 // pred_check_branch
      %20 = sbr.rel (0) target = $region17
    $region16: #{tpu_custom_call.1} parent=1 // pred_region
      _
    $region17: #{tpu_custom_call.1} parent=1 // pred_fallthru
      _
    // Predicated region
    $region18: #{tpu_custom_call.1} parent=1 // pred_check
      _
    $region19: #{tpu_custom_call.1} parent=1 // pred_check_branch
      %22 = sbr.rel (0) target = $region21
    $region20: #{tpu_custom_call.1} parent=1 // pred_region
      _
    $region21: #{tpu_custom_call.1} parent=1 // pred_fallthru
      _
    // Predicated region
    $region22: #{tpu_custom_call.1} parent=1 // pred_check
      _
    $region23: #{tpu_custom_call.1} parent=1 // pred_check_branch
      %24 = sbr.rel (0) target = $region25
    $region24: #{tpu_custom_call.1} parent=1 // pred_region
      _
    $region25: #{tpu_custom_call.1} parent=1 // pred_fallthru
      _
    // Predicated region
    $region26: #{tpu_custom_call.1} parent=1 // pred_check
      _
    $region27: #{tpu_custom_call.1} parent=1 // pred_check_branch
      %26 = sbr.rel (0) target = $region29
    $region28: #{tpu_custom_call.1} parent=1 // pred_region
      _
    $region29: #{tpu_custom_call.1} parent=1 // pred_fallthru
      _
    %v27 = vld [vmem:[%s0] sm:$0xff]
    %v28 = vld [vmem:[%s0 + $0x8] sm:$0xff]
    %v29 = vld [vmem:[%s1] sm:$0xff]
    %v30 = vld [vmem:[%s1 + $0x8] sm:$0xff]
    %v31 = vld [vmem:[%s1 + $0x10] sm:$0xff]
    %v32 = vld [vmem:[%s1 + $0x18] sm:$0xff]
    %v33 = vld [vmem:[%s2] sm:$0x1]
    %v35 = vperm.slane %v33, 0
    %vm37 = vcmask 261120
    %v39 = vsel %vm37, %v27, 0
    %v42 = vsel %vm37, %v28, 0
    %44 = vmatpush.msra.mxu0 0.0
    %45 = vmatpush.msra.mxu0 0.0
    %46 = vmatpush.msra.mxu0 0.0
    %47 = vmatpush.msra.mxu0 0.0
    %48 = vmatpush.msra.mxu0 0.0
    %49 = vmatpush.msra.mxu0 0.0
    %50 = vmatpush.msra.mxu0 0.0
    %51 = vmatpush.msra.mxu0 0.0
    %52 = vmatpush.msra.mxu0 0.0
    %53 = vmatpush.msra.mxu0 0.0
    %54 = vmatpush.msra.mxu0 0.0
    %55 = vmatpush.msra.mxu0 0.0
    %56 = vmatpush.msra.mxu0 %v32
    %57 = vmatpush.msra.mxu0 %v31
    %58 = vmatpush.msra.mxu0 %v30
    %59 = vmatpush.msra.mxu0 %v29
    %60 = vmatmul.f32.gmra.mxu0 %v39
    %v61 = vpop.f32.mrf.mxu0
    %v62 = vadd.f32 %v35, %v61
    %63 = vmatmul.f32.gmra.mxu0 %v42
    %v64 = vpop.f32.mrf.mxu0
    %v65 = vadd.f32 %v35, %v64
    %66 = vdwg.mxu0
    %v67 = vmul.f32 %v62, 0.35355338
    %v68 = vmul.f32 %v65, 0.35355338
    %v69 = vld [vmem:[%s5] sm:$0xff]
    %v70 = vld [vmem:[%s5 + $0x8] sm:$0xff]
    %v71 = vld [vmem:[%s5 + $0x10] sm:$0xff]
    %v72 = vld [vmem:[%s5 + $0x18] sm:$0xff]
    %v73 = vld [vmem:[%s5 + $0x20] sm:$0xff]
    %v74 = vld [vmem:[%s5 + $0x28] sm:$0xff]
    %v75 = vld [vmem:[%s5 + $0x30] sm:$0xff]
    %v76 = vld [vmem:[%s5 + $0x38] sm:$0xff]
    %85 = vrot.lane.b32.xlu0 %v69, 32
    %v86 = vpop.permute.xlu0 %85
    %87 = vrot.lane.b32.xlu0 %v70, 32
    %v88 = vpop.permute.xlu0 %87
    %89 = vrot.lane.b32.xlu0 %v71, 32
    %v90 = vpop.permute.xlu0 %89
    %91 = vrot.lane.b32.xlu0 %v72, 32
    %v92 = vpop.permute.xlu0 %91
    %93 = vrot.lane.b32.xlu0 %v73, 32
    %v94 = vpop.permute.xlu0 %93
    %95 = vrot.lane.b32.xlu0 %v74, 32
    %v96 = vpop.permute.xlu0 %95
    %97 = vrot.lane.b32.xlu0 %v75, 32
    %v98 = vpop.permute.xlu0 %97
    %99 = vrot.lane.b32.xlu0 %v76, 32
    %v100 = vpop.permute.xlu0 %99
    %v109 = vmul.f32 %v62, %v86
    %v110 = vmul.f32 %v65, %v88
    %v111 = vmul.f32 %v62, %v90
    %v112 = vmul.f32 %v65, %v92
    %v113 = vmul.f32 %v62, %v94
    %v114 = vmul.f32 %v65, %v96
    %v115 = vmul.f32 %v62, %v98
    %v116 = vmul.f32 %v65, %v100
    %117 = vrot.lane.b32.xlu0 %v69, 64
    %v118 = vpop.permute.xlu0 %117
    %119 = vrot.lane.b32.xlu0 %v70, 64
    %v120 = vpop.permute.xlu0 %119
    %121 = vrot.lane.b32.xlu0 %v71, 64
    %v122 = vpop.permute.xlu0 %121
    %123 = vrot.lane.b32.xlu0 %v72, 64
    %v124 = vpop.permute.xlu0 %123
    %125 = vrot.lane.b32.xlu0 %v73, 64
    %v126 = vpop.permute.xlu0 %125
    %127 = vrot.lane.b32.xlu0 %v74, 64
    %v128 = vpop.permute.xlu0 %127
    %129 = vrot.lane.b32.xlu0 %v75, 64
    %v130 = vpop.permute.xlu0 %129
    %131 = vrot.lane.b32.xlu0 %v76, 64
    %v132 = vpop.permute.xlu0 %131
    %v141 = vmul.f32 %v62, %v118
    %v142 = vmul.f32 %v65, %v120
    %v143 = vmul.f32 %v62, %v122
    %v144 = vmul.f32 %v65, %v124
    %v145 = vmul.f32 %v62, %v126
    %v146 = vmul.f32 %v65, %v128
    %v147 = vmul.f32 %v62, %v130
    %v148 = vmul.f32 %v65, %v132
    %v149 = vld [vmem:[%s6] sm:$0xff]
    %v150 = vld [vmem:[%s6 + $0x8] sm:$0xff]
    %159 = vrot.lane.b32.xlu0 %v109, 96
    %v160 = vpop.permute.xlu0 %159
    %161 = vrot.lane.b32.xlu0 %v110, 96
    %v162 = vpop.permute.xlu0 %161
    %163 = vrot.lane.b32.xlu0 %v111, 96
    %v164 = vpop.permute.xlu0 %163
    %165 = vrot.lane.b32.xlu0 %v112, 96
    %v166 = vpop.permute.xlu0 %165
    %167 = vrot.lane.b32.xlu0 %v113, 96
    %v168 = vpop.permute.xlu0 %167
    %169 = vrot.lane.b32.xlu0 %v114, 96
    %v170 = vpop.permute.xlu0 %169
    %171 = vrot.lane.b32.xlu0 %v115, 96
    %v172 = vpop.permute.xlu0 %171
    %173 = vrot.lane.b32.xlu0 %v116, 96
    %v174 = vpop.permute.xlu0 %173
    %v176 = vsel %vm37, %v67, 0
    %v179 = vsel %vm37, %v68, 0
    %v181 = vsel %vm37, %v160, 0
    %v183 = vsel %vm37, %v162, 0
    %v185 = vsel %vm37, %v164, 0
    %v187 = vsel %vm37, %v166, 0
    %v189 = vsel %vm37, %v168, 0
    %v191 = vsel %vm37, %v170, 0
    %v193 = vsel %vm37, %v172, 0
    %v195 = vsel %vm37, %v174, 0
    %197 = vmatpush.xpose.msra.mxu0 0.0
    %198 = vmatpush.xpose.msra.mxu0 0.0
    %199 = vmatpush.xpose.msra.mxu0 0.0
    %200 = vmatpush.xpose.msra.mxu0 0.0
    %201 = vmatpush.xpose.msra.mxu0 0.0
    %202 = vmatpush.xpose.msra.mxu0 0.0
    %203 = vmatpush.xpose.msra.mxu0 0.0
    %204 = vmatpush.xpose.msra.mxu0 0.0
    %205 = vmatpush.xpose.msra.mxu0 %v195
    %206 = vmatpush.xpose.msra.mxu0 %v193
    %207 = vmatpush.xpose.msra.mxu0 %v191
    %208 = vmatpush.xpose.msra.mxu0 %v189
    %209 = vmatpush.xpose.msra.mxu0 %v187
    %210 = vmatpush.xpose.msra.mxu0 %v185
    %211 = vmatpush.xpose.msra.mxu0 %v183
    %212 = vmatpush.xpose.msra.mxu0 %v181
    %213 = vmatmul.f32.gmra.mxu0 %v176
    %v214 = vpop.f32.mrf.mxu0
    %v215 = vadd.f32 %v149, %v214
    %216 = vmatmul.f32.gmra.mxu0 %v179
    %v217 = vpop.f32.mrf.mxu0
    %v218 = vadd.f32 %v150, %v217
    %219 = vdwg.mxu0
    %vm220 = vcmask 523264
    %v221 = vsel %vm220, %v215, -inf
    %222 = vmax.xlane.f32.xlu0 %v221
    %v223 = vpop.xlane.xlu0 %222
    %v224 = vsel %vm220, %v218, -inf
    %225 = vmax.xlane.f32.xlu0 %v224
    %v226 = vpop.xlane.xlu0 %225
    %v227 = vsub.f32 %v215, %v223
    %v228 = vsub.f32 %v218, %v226
    %v229 = vmul.f32 %v227, 1.442695
    %v230 = vpow.pop %v229
    %v231 = vmul.f32 %v228, 1.442695
    %v232 = vpow.pop %v231
    %241 = vrot.lane.b32.xlu0 %v141, 64
    %v242 = vpop.permute.xlu0 %241
    %243 = vrot.lane.b32.xlu0 %v142, 64
    %v244 = vpop.permute.xlu0 %243
    %245 = vrot.lane.b32.xlu0 %v143, 64
    %v246 = vpop.permute.xlu0 %245
    %247 = vrot.lane.b32.xlu0 %v144, 64
    %v248 = vpop.permute.xlu0 %247
    %249 = vrot.lane.b32.xlu0 %v145, 64
    %v250 = vpop.permute.xlu0 %249
    %251 = vrot.lane.b32.xlu0 %v146, 64
    %v252 = vpop.permute.xlu0 %251
    %253 = vrot.lane.b32.xlu0 %v147, 64
    %v254 = vpop.permute.xlu0 %253
    %255 = vrot.lane.b32.xlu0 %v148, 64
    %v256 = vpop.permute.xlu0 %255
    %v266 = vsel %vm220, %v230, 0
    %v269 = vsel %vm220, %v232, 0
    %271 = vmatpush.msra.mxu0 0.0
    %272 = vmatpush.msra.mxu0 0.0
    %273 = vmatpush.msra.mxu0 0.0
    %274 = vmatpush.msra.mxu0 0.0
    %275 = vmatpush.msra.mxu0 0.0
    %276 = vmatpush.msra.mxu0 0.0
    %277 = vmatpush.msra.mxu0 0.0
    %278 = vmatpush.msra.mxu0 0.0
    %279 = vmatpush.msra.mxu0 %v256
    %280 = vmatpush.msra.mxu0 %v254
    %281 = vmatpush.msra.mxu0 %v252
    %282 = vmatpush.msra.mxu0 %v250
    %283 = vmatpush.msra.mxu0 %v248
    %284 = vmatpush.msra.mxu0 %v246
    %285 = vmatpush.msra.mxu0 %v244
    %286 = vmatpush.msra.mxu0 %v242
    %287 = vmatmul.f32.gmra.mxu0 %v266
    %v288 = vpop.f32.mrf.mxu0
    %v289 = vadd.f32 0.0, %v288
    %290 = vmatmul.f32.gmra.mxu0 %v269
    %v291 = vpop.f32.mrf.mxu0
    %v292 = vadd.f32 0.0, %v291
    %293 = vdwg.mxu0
    %294 = vmatpush.msra.mxu0 0.0
    %295 = vmatpush.msra.mxu0 0.0
    %296 = vmatpush.msra.mxu0 0.0
    %297 = vmatpush.msra.mxu0 0.0
    %298 = vmatpush.msra.mxu0 0.0
    %299 = vmatpush.msra.mxu0 0.0
    %300 = vmatpush.msra.mxu0 0.0
    %301 = vmatpush.msra.mxu0 0.0
    %302 = vmatpush.msra.mxu0 %v76
    %303 = vmatpush.msra.mxu0 %v75
    %304 = vmatpush.msra.mxu0 %v74
    %305 = vmatpush.msra.mxu0 %v73
    %306 = vmatpush.msra.mxu0 %v72
    %307 = vmatpush.msra.mxu0 %v71
    %308 = vmatpush.msra.mxu0 %v70
    %309 = vmatpush.msra.mxu0 %v69
    %310 = vmatmul.f32.gmra.mxu0 %v266
    %v311 = vpop.f32.mrf.mxu0
    %v312 = vadd.f32 0.0, %v311
    %313 = vmatmul.f32.gmra.mxu0 %v269
    %v314 = vpop.f32.mrf.mxu0
    %v315 = vadd.f32 0.0, %v314
    %316 = vdwg.mxu0
    %v317 = vmax.f32 %v312, 1e-38
    %v318 = vmax.f32 %v315, 1e-38
    %v319 = vrcp.pop %v317
    %v320 = vmul.f32 %v317, %v319
    %v321 = vsub.f32 1.0, %v320
    %v322 = vmul.f32 %v319, %v321
    %v323 = vadd.f32 %v319, %v322
    %vm324 = vweird.f32 %v317
    %vm325 = vweird.f32 %v319
    %vm326 = vmor %vm324, %vm325
    %v327 = vsel %vm326, %v319, %v323
    %v328 = vand.u32 2147483647, %v317
    %vm329 = vcmp.eq.f32.partialorder %v328, 8.507059e+37
    %v330 = vand.u32 %v317, 2147483648
    %v331 = vor.u32 1.1754944e-38, %v330
    %v332 = vsel %vm329, %v331, %v327
    %v333 = vmul.f32 1.0, %v332
    %v334 = vrcp.pop %v318
    %v335 = vmul.f32 %v318, %v334
    %v336 = vsub.f32 1.0, %v335
    %v337 = vmul.f32 %v334, %v336
    %v338 = vadd.f32 %v334, %v337
    %vm339 = vweird.f32 %v318
    %vm340 = vweird.f32 %v334
    %vm341 = vmor %vm339, %vm340
    %v342 = vsel %vm341, %v334, %v338
    %v343 = vand.u32 2147483647, %v318
    %vm344 = vcmp.eq.f32.partialorder %v343, 8.507059e+37
    %v345 = vand.u32 %v318, 2147483648
    %v346 = vor.u32 1.1754944e-38, %v345
    %v347 = vsel %vm344, %v346, %v342
    %v348 = vmul.f32 1.0, %v347
    %v349 = vmul.f32 %v289, %v333
    %v350 = vmul.f32 %v292, %v348
    %v351 = vld [vmem:[%s3] sm:$0xff]
    %v352 = vld [vmem:[%s3 + $0x8] sm:$0xff]
    %v353 = vld [vmem:[%s3 + $0x10] sm:$0xff]
    %v354 = vld [vmem:[%s3 + $0x18] sm:$0xff]
    %v355 = vld [vmem:[%s4] sm:$0x1]
    %v357 = vperm.slane %v355, 0
    %v360 = vsel %vm37, %v349, 0
    %v363 = vsel %vm37, %v350, 0
    %365 = vmatpush.msra.mxu0 0.0
    %366 = vmatpush.msra.mxu0 0.0
    %367 = vmatpush.msra.mxu0 0.0
    %368 = vmatpush.msra.mxu0 0.0
    %369 = vmatpush.msra.mxu0 0.0
    %370 = vmatpush.msra.mxu0 0.0
    %371 = vmatpush.msra.mxu0 0.0
    %372 = vmatpush.msra.mxu0 0.0
    %373 = vmatpush.msra.mxu0 0.0
    %374 = vmatpush.msra.mxu0 0.0
    %375 = vmatpush.msra.mxu0 0.0
    %376 = vmatpush.msra.mxu0 0.0
    %377 = vmatpush.msra.mxu0 %v354
    %378 = vmatpush.msra.mxu0 %v353
    %379 = vmatpush.msra.mxu0 %v352
    %380 = vmatpush.msra.mxu0 %v351
    %381 = vmatmul.f32.gmra.mxu0 %v360
    %v382 = vpop.f32.mrf.mxu0
    %v383 = vadd.f32 %v357, %v382
    %384 = vmatmul.f32.gmra.mxu0 %v363
    %v385 = vpop.f32.mrf.mxu0
    %v386 = vadd.f32 %v357, %v385
    %387 = vdwg.mxu0
    %388 = vst.msk [vmem:[#allocation2] sm:$0xff] %vm37, %v383
    %389 = vst.msk [vmem:[#allocation2 + $0x8] sm:$0xff] %vm37, %v386
    // Predicated region
    $region30: #{tpu_custom_call.1} parent=1 // pred_check
      _
    $region31: #{tpu_custom_call.1} parent=1 // pred_check_branch
      %391 = sbr.rel (0) target = $region33
    $region32: #{tpu_custom_call.1} parent=1 // pred_region
      %393 = vsyncadd [#allocation3], 0
      %s394 = sshll.u32 [#allocation2], 4
      %s395 = int_to_ptr.vmem [resolvable:$true] %s394
      %s396 = sshll.u32 %s7, 4
      %s397 = int_to_ptr.hbm [resolvable:$true] %s396
      %402 = dma.vmem_to_hbm [thread:$0]  %s395, 256, %s397, [#allocation3], 128, 128, 8
    $region33: #{tpu_custom_call.1} parent=1 // pred_fallthru
      _
    // Predicated region
    $region34: #{tpu_custom_call.1} parent=1 // pred_check
      _
    $region35: #{tpu_custom_call.1} parent=1 // pred_check_branch
      %404 = sbr.rel (0) target = $region37
    $region36: #{tpu_custom_call.1} parent=1 // pred_region
      %406 = dma.done [#allocation3], 256
    $region37: #{tpu_custom_call.1} parent=1 // pred_fallthru
      _
    %407 = vsyncpa [#allocation3], 1

</llo_original>
